<compile_context>
chip_gen: v7x
topology: tpu7x:2x2x1
jax: 0.10.0
libtpu: 0.0.40
codegen_flags: <defaults>
</compile_context>

<pallas_src>
import functools

import jax
import jax.numpy as jnp
from jax.experimental import pallas as pl
from jax.experimental.pallas import tpu as pltpu


HIDDEN_DIM = 32
NUM_LAYERS = 2
LEAKY_SLOPE = 0.01   # torch.nn.functional.leaky_relu default
LN_EPS = 1e-5        # torch.nn.functional.layer_norm default
WCOL = 128           # lane-dense weight-slab width -> unmasked (8,128) DMA


def _round_up(x, m):
    return (x + m - 1) // m * m


# ----------------------------------------------------------------------------
# Kernel: one batch tile, activations laid out as (features, batch_tile).
# ----------------------------------------------------------------------------
def nn_forward_kernel(x_ref, w_ref, o_ref, *, hidden, num_layers,
                      batch_major_out):
    """Batch lives on the 128-wide lane axis.  All biases are realized inside
    the matmuls via a constant-1 feature row that the packed weight blocks
    propagate from layer to layer (no bias broadcasts/adds in the kernel)."""
    h2 = 2 * hidden
    hp = hidden + 8          # hidden features + [1, 0, ..., 0] tail block
    h2p = h2 + 8
    k_pad = x_ref.shape[0]   # zero-padded input features (incl. the ones row)

    xb = x_ref[...]          # (k_pad, TB); row `in_dim` is the constant 1.0 row

    # inLayer (augmented): rows [0:hidden] = W_in @ x + b_in, row `hidden` = 1.
    h_aug = jnp.dot(w_ref[0:hp, 0:k_pad], xb,
                    preferred_element_type=jnp.float32)           # (hp, TB)

    row = hp
    for _ in range(num_layers):                                   # static unroll
        wu = w_ref[row:row + h2p, 0:hp]
        row += h2p
        wl = w_ref[row:row + hidden, 0:h2p]
        row += hidden

        # upper Linear(H -> 2H) (+bias via ones row) + leaky_relu
        x2 = jnp.dot(wu, h_aug, preferred_element_type=jnp.float32)  # (h2p, TB)
        x2 = jnp.where(x2 > 0, x2, LEAKY_SLOPE * x2)   # leaky(1)=1, leaky(0)=0

        # lower Linear(2H -> H) (+bias) + LayerNorm over features (axis 0 here)
        y = jnp.dot(wl, x2, preferred_element_type=jnp.float32)      # (H, TB)
        mean = jnp.mean(y, axis=0, keepdims=True)
        d = y - mean
        var = jnp.mean(d * d, axis=0, keepdims=True)
        y = d * jax.lax.rsqrt(var + LN_EPS)

        # residual on the feature rows; keep the [1,0,...,0] tail rows intact
        h_aug = jnp.concatenate([h_aug[0:hidden, :] + y, h_aug[hidden:, :]],
                                axis=0)

    h = h_aug[0:hidden, :]
    if batch_major_out:
        # (H, TB) -> (TB, H) on the XLU: avoids a separate XLA transpose pass
        # (extra HBM read + write) in the wrapper.
        o_ref[...] = h.T.astype(o_ref.dtype)
    else:
        o_ref[...] = h.astype(o_ref.dtype)


# ----------------------------------------------------------------------------
# Host-side parameter handling
# ----------------------------------------------------------------------------
def init_params(key, in_dim, hidden=HIDDEN_DIM, num_layers=NUM_LAYERS):
    """PyTorch nn.Linear-style init, PyTorch (out_features, in_features) layout."""
    def linear(k, fan_in, fan_out):
        kw, kb = jax.random.split(k)
        bound = 1.0 / jnp.sqrt(float(fan_in))
        w = jax.random.uniform(kw, (fan_out, fan_in), jnp.float32, -bound, bound)
        b = jax.random.uniform(kb, (fan_out,), jnp.float32, -bound, bound)
        return w, b

    keys = jax.random.split(key, 1 + 2 * num_layers)
    params = {}
    params["w_in"], params["b_in"] = linear(keys[0], in_dim, hidden)
    for l in range(num_layers):
        params[f"wu{l}"], params[f"bu{l}"] = linear(keys[1 + 2 * l], hidden, 2 * hidden)
        params[f"wl{l}"], params[f"bl{l}"] = linear(keys[2 + 2 * l], 2 * hidden, hidden)
    return params


def pack_params(params, in_dim, hidden=HIDDEN_DIM, num_layers=NUM_LAYERS):
    """Pack all weights AND biases into one zero-padded (rows, 128) f32 slab.

    Each linear block is augmented so it is a single matmul:
      [:out, :fan_in]   = W
      [:out,  fan_in]   = b      (multiplied by the constant-1 activation row)
      [ out,  ones_col] = 1      (re-emits the constant-1 row for the next layer)
    Assumes in_dim + 1 <= 128 and 2*hidden + 8 <= 128.
    """
    h2 = 2 * hidden
    hp, h2p = hidden + 8, h2 + 8
    assert hidden % 8 == 0 and h2p <= WCOL and in_dim + 1 <= WCOL
    k_pad = _round_up(in_dim + 1, 8)          # input features + ones row

    def block(w, b, n_rows, ones_in_col=None):
        out_f, in_f = w.shape
        blk = jnp.zeros((n_rows, WCOL), jnp.float32)
        blk = blk.at[:out_f, :in_f].set(w.astype(jnp.float32))
        blk = blk.at[:out_f, in_f].set(b.astype(jnp.float32))
        if ones_in_col is not None:           # propagate the constant-1 row
            blk = blk.at[out_f, ones_in_col].set(1.0)
        return blk

    blocks = [block(params["w_in"], params["b_in"], hp, ones_in_col=in_dim)]
    for l in range(num_layers):
        blocks.append(block(params[f"wu{l}"], params[f"bu{l}"], h2p,
                            ones_in_col=hidden))
        blocks.append(block(params[f"wl{l}"], params[f"bl{l}"], hidden))
    w_slab = jnp.concatenate(blocks, axis=0)  # (hp + L*(h2p+hidden), 128) = (248, 128)
    return w_slab, k_pad


def _choose_batch_tiling(batch, max_tile=2048, align=256):
    """Pick (padded_batch, batch_tile).  Tiles are multiples of 256 (full MXU
    result width on v6e/v7x) and as large as possible (up to max_tile) to
    amortize the ~0.35 us per-grid-step overhead; when more than one tile is
    needed the tile count is kept EVEN so the 'parallel' grid axis can be
    split across v7x's two TensorCores."""
    b_pad = max(align, _round_up(batch, align))
    if b_pad <= align:
        return b_pad, b_pad                   # tiny batch: a single 256-wide tile
    n_tiles = max(2, -(-b_pad // max_tile))
    if n_tiles % 2:
        n_tiles += 1
    tb = _round_up(-(-b_pad // n_tiles), align)
    return tb * n_tiles, tb


# ----------------------------------------------------------------------------
# Wrapper: grid over batch tiles, parameter slab VMEM-resident.
# ----------------------------------------------------------------------------
def nn_forward(x, params, *, hidden=HIDDEN_DIM, num_layers=NUM_LAYERS,
               max_batch_tile=2048, batch_major_out=True):
    """x: (B, in_dim) f32 ->
         (B, hidden) f32   if batch_major_out (PyTorch layout, in-kernel transpose)
         (hidden, B) f32   otherwise (zero-transpose, fully lane-dense store)."""
    B, in_dim = x.shape
    w_slab, k_pad = pack_params(params, in_dim, hidden, num_layers)
    b_pad, tb = _choose_batch_tiling(B, max_batch_tile)
    n_tiles = b_pad // tb

    # Batch on lanes: (k_pad, b_pad).  Row `in_dim` is the constant-1 row that
    # realizes every bias add inside the matmuls.
    x_t = jnp.zeros((k_pad, b_pad), jnp.float32)
    x_t = x_t.at[:in_dim, :B].set(x.T.astype(jnp.float32))
    x_t = x_t.at[in_dim, :].set(1.0)

    if batch_major_out:
        out_shape = jax.ShapeDtypeStruct((b_pad, hidden), jnp.float32)
        out_spec = pl.BlockSpec((tb, hidden), lambda i: (i, 0))
    else:
        out_shape = jax.ShapeDtypeStruct((hidden, b_pad), jnp.float32)
        out_spec = pl.BlockSpec((hidden, tb), lambda i: (0, i))

    kernel = functools.partial(nn_forward_kernel, hidden=hidden,
                               num_layers=num_layers,
                               batch_major_out=batch_major_out)

    hp, h2p = hidden + 8, 2 * hidden + 8
    flops = 2 * b_pad * (hp * k_pad + num_layers * (h2p * hp + hidden * h2p))
    bytes_accessed = (x_t.size + b_pad * hidden + w_slab.size) * 4

    out = pl.pallas_call(
        kernel,
        out_shape=out_shape,
        grid=(n_tiles,),
        in_specs=[
            # activations: one pipelined (double-buffered) batch tile per step
            pl.BlockSpec((k_pad, tb), lambda i: (0, i)),
            # packed parameter slab: constant block index -> copied once,
            # VMEM-resident across the whole grid (one unmasked 128-lane DMA)
            pl.BlockSpec(w_slab.shape, lambda i: (0, 0)),
        ],
        out_specs=out_spec,
        compiler_params=pltpu.CompilerParams(
            dimension_semantics=("parallel",)),   # batch tiles across v7x's 2 TCs
        cost_estimate=pl.CostEstimate(flops=flops,
                                      transcendentals=b_pad * num_layers,
                                      bytes_accessed=bytes_accessed),
    )(x_t, w_slab)

    # Slice away batch padding (identity slice when B is already tile-aligned).
    return out[:B] if batch_major_out else out[:, :B]


# ----------------------------------------------------------------------------
# Pure-JAX reference (PyTorch layout) for correctness checks.
# HIGHEST matmul precision to match the kernel's (near-)f32 MXU matmuls.
# ----------------------------------------------------------------------------
def nn_forward_ref(x, params, hidden=HIDDEN_DIM, num_layers=NUM_LAYERS):
    hi = jax.lax.Precision.HIGHEST
    h = jnp.dot(x, params["w_in"].T, precision=hi) + params["b_in"]
    for l in range(num_layers):
        x2 = jnp.dot(h, params[f"wu{l}"].T, precision=hi) + params[f"bu{l}"]
        x2 = jnp.where(x2 > 0, x2, LEAKY_SLOPE * x2)
        x2 = jnp.dot(x2, params[f"wl{l}"].T, precision=hi) + params[f"bl{l}"]
        mean = jnp.mean(x2, axis=-1, keepdims=True)
        var = jnp.mean((x2 - mean) * (x2 - mean), axis=-1, keepdims=True)
        x2 = (x2 - mean) * jax.lax.rsqrt(var + LN_EPS)
        h = h + x2
    return h


if __name__ == "__main__":
    key = jax.random.PRNGKey(0)
    kx, kp, kb = jax.random.split(key, 3)

    IN_DIM = 4  # CartPole observation dim
    params = init_params(kp, IN_DIM)

    # Small-shape check (typical single-step actor-critic use).
    x_small = jax.random.normal(kx, (2, IN_DIM), dtype=jnp.float32)
    out_small = jax.block_until_ready(nn_forward(x_small, params))
    ref_small = nn_forward_ref(x_small, params)
    assert out_small.shape == (2, HIDDEN_DIM)
    assert jnp.allclose(out_small, ref_small, atol=1e-4, rtol=1e-4), \
        float(jnp.max(jnp.abs(out_small - ref_small)))

    # Batched check: exercises the multi-tile (even-count) parallel batch grid.
    x_big = jax.random.normal(kb, (512, IN_DIM), dtype=jnp.float32)
    out_big = jax.block_until_ready(nn_forward(x_big, params))
    ref_big = nn_forward_ref(x_big, params)
    assert out_big.shape == (512, HIDDEN_DIM)
    assert jnp.allclose(out_big, ref_big, atol=1e-4, rtol=1e-4), \
        float(jnp.max(jnp.abs(out_big - ref_big)))

    # Zero-transpose (feature-major) output path.
    out_fm = jax.block_until_ready(nn_forward(x_big, params, batch_major_out=False))
    assert out_fm.shape == (HIDDEN_DIM, 512)
    assert jnp.allclose(out_fm, ref_big.T, atol=1e-4, rtol=1e-4)

    print("KERNEL_OK")
</pallas_src>

<mosaic_0001>
module attributes {stable_mosaic.version = 11 : i64} {
  func.func @nn_forward_kernel(%arg0: i32, %arg1: memref<8x256xf32, #tpu.memory_space<vmem>>, %arg2: memref<248x128xf32, #tpu.memory_space<vmem>>, %arg3: memref<256x32xf32, #tpu.memory_space<vmem>>) attributes {dimension_semantics = [#tpu.dimension_semantics<parallel>], iteration_bounds = array<i64: 1>, scalar_prefetch = 0 : i64, scratch_operands = 0 : i64, tpu.core_type = #tpu.core_type<tc>, window_params = [{transform_indices = @transform_0, window_bounds = array<i64: 8, 256>}, {pipeline_mode = #tpu.pipeline_mode<synchronous>, transform_indices = @transform_1, window_bounds = array<i64: 248, 128>}, {transform_indices = @transform_2, window_bounds = array<i64: 256, 32>}]} {
    %c0 = arith.constant 0 : index
    %c0_0 = arith.constant 0 : index
    %0 = vector.load %arg1[%c0, %c0_0] : memref<8x256xf32, #tpu.memory_space<vmem>>, vector<8x256xf32>
    %c0_1 = arith.constant 0 : index
    %c0_2 = arith.constant 0 : index
    %1 = vector.load %arg2[%c0_1, %c0_2] : memref<248x128xf32, #tpu.memory_space<vmem>>, vector<40x8xf32>
    %cst = arith.constant dense<0.000000e+00> : vector<40x256xf32>
    %2 = tpu.matmul %1, %0, %cst {dimension_numbers = #tpu.dot_dimension_numbers<[1], [0], [0], [1], [0, 0, 1, 1], [], []>} : vector<40x8xf32>, vector<8x256xf32>, vector<40x256xf32> -> vector<40x256xf32>
    %c40 = arith.constant 40 : index
    %c0_3 = arith.constant 0 : index
    %3 = vector.load %arg2[%c40, %c0_3] : memref<248x128xf32, #tpu.memory_space<vmem>>, vector<72x40xf32>
    %c112 = arith.constant 112 : index
    %c0_4 = arith.constant 0 : index
    %4 = vector.load %arg2[%c112, %c0_4] : memref<248x128xf32, #tpu.memory_space<vmem>>, vector<32x72xf32>
    %cst_5 = arith.constant dense<0.000000e+00> : vector<72x256xf32>
    %5 = tpu.matmul %3, %2, %cst_5 {dimension_numbers = #tpu.dot_dimension_numbers<[1], [0], [0], [1], [0, 0, 1, 1], [], []>} : vector<72x40xf32>, vector<40x256xf32>, vector<72x256xf32> -> vector<72x256xf32>
    %cst_6 = arith.constant 0.000000e+00 : f32
    %6 = vector.broadcast %cst_6 : f32 to vector<72x256xf32>
    %7 = arith.cmpf ogt, %5, %6 : vector<72x256xf32>
    %cst_7 = arith.constant 0.00999999977 : f32
    %8 = vector.broadcast %cst_7 : f32 to vector<72x256xf32>
    %9 = arith.mulf %8, %5 : vector<72x256xf32>
    %10 = arith.select %7, %5, %9 : vector<72x256xi1>, vector<72x256xf32>
    %cst_8 = arith.constant dense<0.000000e+00> : vector<32x256xf32>
    %11 = tpu.matmul %4, %10, %cst_8 {dimension_numbers = #tpu.dot_dimension_numbers<[1], [0], [0], [1], [0, 0, 1, 1], [], []>} : vector<32x72xf32>, vector<72x256xf32>, vector<32x256xf32> -> vector<32x256xf32>
    %cst_9 = arith.constant dense<0.000000e+00> : vector<256xf32>
    %12 = vector.multi_reduction <add>, %11, %cst_9 [0] : vector<32x256xf32> to vector<256xf32>
    %13 = vector.shape_cast %12 : vector<256xf32> to vector<1x256xf32>
    %cst_10 = arith.constant 3.200000e+01 : f32
    %14 = vector.broadcast %cst_10 : f32 to vector<1x256xf32>
    %15 = arith.divf %13, %14 : vector<1x256xf32>
    %16 = vector.broadcast %15 : vector<1x256xf32> to vector<32x256xf32>
    %17 = arith.subf %11, %16 : vector<32x256xf32>
    %18 = arith.mulf %17, %17 : vector<32x256xf32>
    %cst_11 = arith.constant dense<0.000000e+00> : vector<256xf32>
    %19 = vector.multi_reduction <add>, %18, %cst_11 [0] : vector<32x256xf32> to vector<256xf32>
    %20 = vector.shape_cast %19 : vector<256xf32> to vector<1x256xf32>
    %cst_12 = arith.constant 3.200000e+01 : f32
    %21 = vector.broadcast %cst_12 : f32 to vector<1x256xf32>
    %22 = arith.divf %20, %21 : vector<1x256xf32>
    %cst_13 = arith.constant 9.99999974E-6 : f32
    %23 = vector.broadcast %cst_13 : f32 to vector<1x256xf32>
    %24 = arith.addf %22, %23 : vector<1x256xf32>
    %25 = math.rsqrt %24 : vector<1x256xf32>
    %26 = vector.broadcast %25 : vector<1x256xf32> to vector<32x256xf32>
    %27 = arith.mulf %17, %26 : vector<32x256xf32>
    %28 = vector.extract_strided_slice %2 {offsets = [0, 0], sizes = [32, 256], strides = [1, 1]} : vector<40x256xf32> to vector<32x256xf32>
    %29 = arith.addf %28, %27 : vector<32x256xf32>
    %30 = vector.extract_strided_slice %2 {offsets = [32, 0], sizes = [8, 256], strides = [1, 1]} : vector<40x256xf32> to vector<8x256xf32>
    %31 = tpu.concatenate %29, %30 in 0 : vector<32x256xf32>, vector<8x256xf32> -> vector<40x256xf32>
    %c144 = arith.constant 144 : index
    %c0_14 = arith.constant 0 : index
    %32 = vector.load %arg2[%c144, %c0_14] : memref<248x128xf32, #tpu.memory_space<vmem>>, vector<72x40xf32>
    %c216 = arith.constant 216 : index
    %c0_15 = arith.constant 0 : index
    %33 = vector.load %arg2[%c216, %c0_15] : memref<248x128xf32, #tpu.memory_space<vmem>>, vector<32x72xf32>
    %cst_16 = arith.constant dense<0.000000e+00> : vector<72x256xf32>
    %34 = tpu.matmul %32, %31, %cst_16 {dimension_numbers = #tpu.dot_dimension_numbers<[1], [0], [0], [1], [0, 0, 1, 1], [], []>} : vector<72x40xf32>, vector<40x256xf32>, vector<72x256xf32> -> vector<72x256xf32>
    %cst_17 = arith.constant 0.000000e+00 : f32
    %35 = vector.broadcast %cst_17 : f32 to vector<72x256xf32>
    %36 = arith.cmpf ogt, %34, %35 : vector<72x256xf32>
    %cst_18 = arith.constant 0.00999999977 : f32
    %37 = vector.broadcast %cst_18 : f32 to vector<72x256xf32>
    %38 = arith.mulf %37, %34 : vector<72x256xf32>
    %39 = arith.select %36, %34, %38 : vector<72x256xi1>, vector<72x256xf32>
    %cst_19 = arith.constant dense<0.000000e+00> : vector<32x256xf32>
    %40 = tpu.matmul %33, %39, %cst_19 {dimension_numbers = #tpu.dot_dimension_numbers<[1], [0], [0], [1], [0, 0, 1, 1], [], []>} : vector<32x72xf32>, vector<72x256xf32>, vector<32x256xf32> -> vector<32x256xf32>
    %cst_20 = arith.constant dense<0.000000e+00> : vector<256xf32>
    %41 = vector.multi_reduction <add>, %40, %cst_20 [0] : vector<32x256xf32> to vector<256xf32>
    %42 = vector.shape_cast %41 : vector<256xf32> to vector<1x256xf32>
    %cst_21 = arith.constant 3.200000e+01 : f32
    %43 = vector.broadcast %cst_21 : f32 to vector<1x256xf32>
    %44 = arith.divf %42, %43 : vector<1x256xf32>
    %45 = vector.broadcast %44 : vector<1x256xf32> to vector<32x256xf32>
    %46 = arith.subf %40, %45 : vector<32x256xf32>
    %47 = arith.mulf %46, %46 : vector<32x256xf32>
    %cst_22 = arith.constant dense<0.000000e+00> : vector<256xf32>
    %48 = vector.multi_reduction <add>, %47, %cst_22 [0] : vector<32x256xf32> to vector<256xf32>
    %49 = vector.shape_cast %48 : vector<256xf32> to vector<1x256xf32>
    %cst_23 = arith.constant 3.200000e+01 : f32
    %50 = vector.broadcast %cst_23 : f32 to vector<1x256xf32>
    %51 = arith.divf %49, %50 : vector<1x256xf32>
    %cst_24 = arith.constant 9.99999974E-6 : f32
    %52 = vector.broadcast %cst_24 : f32 to vector<1x256xf32>
    %53 = arith.addf %51, %52 : vector<1x256xf32>
    %54 = math.rsqrt %53 : vector<1x256xf32>
    %55 = vector.broadcast %54 : vector<1x256xf32> to vector<32x256xf32>
    %56 = arith.mulf %46, %55 : vector<32x256xf32>
    %57 = vector.extract_strided_slice %31 {offsets = [0, 0], sizes = [32, 256], strides = [1, 1]} : vector<40x256xf32> to vector<32x256xf32>
    %58 = arith.addf %57, %56 : vector<32x256xf32>
    %59 = vector.extract_strided_slice %31 {offsets = [32, 0], sizes = [8, 256], strides = [1, 1]} : vector<40x256xf32> to vector<8x256xf32>
    %60 = tpu.concatenate %58, %59 in 0 : vector<32x256xf32>, vector<8x256xf32> -> vector<40x256xf32>
    %61 = vector.extract_strided_slice %60 {offsets = [0, 0], sizes = [32, 256], strides = [1, 1]} : vector<40x256xf32> to vector<32x256xf32>
    %62 = tpu.transpose %61, [1, 0] : vector<32x256xf32> -> vector<256x32xf32>
    %c0_25 = arith.constant 0 : index
    %c0_26 = arith.constant 0 : index
    %63 = vector.load %arg3[%c0_25, %c0_26] : memref<256x32xf32, #tpu.memory_space<vmem>>, vector<256x32xf32>
    tpu.vector_store %arg3[%c0_25, %c0_26], %62 {strides = array<i32>} : memref<256x32xf32, #tpu.memory_space<vmem>>, vector<256x32xf32>,
    return
  }
  func.func @transform_0(%arg0: i32) -> (i32, i32) {
    %c0_i32 = arith.constant 0 : i32
    %c0_i32_0 = arith.constant 0 : i32
    return %c0_i32, %arg0 : i32, i32
  }
  func.func @transform_1(%arg0: i32) -> (i32, i32) {
    %c0_i32 = arith.constant 0 : i32
    %c0_i32_0 = arith.constant 0 : i32
    %c0_i32_1 = arith.constant 0 : i32
    return %c0_i32, %c0_i32_0 : i32, i32
  }
  func.func @transform_2(%arg0: i32) -> (i32, i32) {
    %c0_i32 = arith.constant 0 : i32
    %c0_i32_0 = arith.constant 0 : i32
    return %arg0, %c0_i32 : i32, i32
  }
}

</mosaic_0001>

<llo_original>
// kernel: tpu_custom_call.1
$region0: #{tpu_custom_call.1}
  #allocation0 [shape = 'u32[]', space=smem, size = 0x4, offset = 0x4, fixed_abs, tag = 'smem constant byte address 0x4 - core index']
  #allocation1 [shape = 'u32[144,128]{1,0:T(1,128)}', space=vmem, size = 0x12000, scoped, tag = 'internal scratch']
  %s0 = inlined_call_operand.hbm [shape: f32[8,256], index: 0, kind: input, shape index: {}]
  %s1 = inlined_call_operand.hbm [shape: f32[248,128], index: 1, kind: input, shape index: {}]
  %s2 = inlined_call_operand.vmem [shape: f32[256,32], index: 2, kind: output, shape index: {}]
  %s3 = sld [smem:[#allocation0]]
  $region26: #{tpu_custom_call.1} parent=0
    _
  %s5 = ssub.s32 1, %s3
  %s6 = scalar_select 0, %s5, %s3
  $region1: #{tpu_custom_call.1} parent=0
    #allocation2 [shape = 'u8[8192]{0}', space=vmem, size = 0x2000, scoped, tag = 'input window, operand 0, single buffered']
    #allocation3 [shape = 's32[1]{0}', space=sflag, size = 0x4, scoped, tag = 'scoped memory for tpu_custom_call.1']
    #allocation4 [shape = 'u8[126976]{0}', space=vmem, size = 0x1f000, scoped, tag = 'input window, operand 1, single buffered']
    #allocation5 [shape = 's32[1]{0}', space=sflag, size = 0x4, scoped, tag = 'scoped memory for tpu_custom_call.1']
    %7 = vsyncpa [#allocation3], 0
    %8 = vsyncpa [#allocation5], 0
    // Predicated region
    $region2: #{tpu_custom_call.1} parent=1 // pred_check
      _
    $region3: #{tpu_custom_call.1} parent=1 // pred_check_branch
      %10 = sbr.rel (0) target = $region5
    $region4: #{tpu_custom_call.1} parent=1 // pred_region
      %s12 = ssub.s32 256, 256
      %13 = vsyncadd [#allocation3], %s12
      %s15 = sshll.u32 [#allocation2], 4
      %s16 = int_to_ptr.vmem [resolvable:$true] %s15
      %18 = dma.hbm_to_vmem [thread:$0]  %s0, 256, %s16, [#allocation3]
    $region5: #{tpu_custom_call.1} parent=1 // pred_fallthru
      _
    // Predicated region
    $region6: #{tpu_custom_call.1} parent=1 // pred_check
      _
    $region7: #{tpu_custom_call.1} parent=1 // pred_check_branch
      %20 = sbr.rel (0) target = $region9
    $region8: #{tpu_custom_call.1} parent=1 // pred_region
      %s22 = ssub.s32 3968, 3968
      %23 = vsyncadd [#allocation5], %s22
      %s24 = sshll.u32 [#allocation4], 4
      %s25 = int_to_ptr.vmem [resolvable:$true] %s24
      %30 = dma.hbm_to_vmem [thread:$0]  %s1, 3968, %s25, [#allocation5], 128, 128, 8
    $region9: #{tpu_custom_call.1} parent=1 // pred_fallthru
      _
    // Predicated region
    $region10: #{tpu_custom_call.1} parent=1 // pred_check
      _
    $region11: #{tpu_custom_call.1} parent=1 // pred_check_branch
      %32 = sbr.rel (0) target = $region13
    $region12: #{tpu_custom_call.1} parent=1 // pred_region
      %33 = dma.done [#allocation3], 256
    $region13: #{tpu_custom_call.1} parent=1 // pred_fallthru
      _
    // Predicated region
    $region14: #{tpu_custom_call.1} parent=1 // pred_check
      _
    $region15: #{tpu_custom_call.1} parent=1 // pred_check_branch
      %35 = sbr.rel (0) target = $region17
    $region16: #{tpu_custom_call.1} parent=1 // pred_region
      %36 = dma.done [#allocation5], 3968
    $region17: #{tpu_custom_call.1} parent=1 // pred_fallthru
      _
    %v37 = vld [vmem:[#allocation2] sm:$0xff]
    %v38 = vld [vmem:[#allocation2 + $0x8] sm:$0xff]
    %v39 = vld [vmem:[#allocation4] sm:$0xff]
    %v40 = vld [vmem:[#allocation4 + $0x8] sm:$0xff]
    %v41 = vld [vmem:[#allocation4 + $0x10] sm:$0xff]
    %v42 = vld [vmem:[#allocation4 + $0x18] sm:$0xff]
    %v43 = vld [vmem:[#allocation4 + $0x20] sm:$0xff]
    %vm44 = vcmask 64512
    %v46 = vsel %vm44, %v39, 0
    %v49 = vsel %vm44, %v40, 0
    %v52 = vsel %vm44, %v41, 0
    %v55 = vsel %vm44, %v42, 0
    %v58 = vsel %vm44, %v43, 0
    %60 = vmatprep.subr.mxu0 %v38
    %61 = vmatpush1.msra.mxu0 %v37
    %62 = vmatprep.subr.mxu0 0.0
    %63 = vmatpush1.msra.mxu0 0.0
    %64 = vmatprep.subr.mxu0 0.0
    %65 = vmatpush1.msra.mxu0 0.0
    %66 = vmatprep.subr.mxu0 0.0
    %67 = vmatpush1.msra.mxu0 0.0
    %68 = vmatprep.subr.mxu0 0.0
    %69 = vmatpush1.msra.mxu0 0.0
    %70 = vmatprep.subr.mxu0 0.0
    %71 = vmatpush1.msra.mxu0 0.0
    %72 = vmatprep.subr.mxu0 0.0
    %73 = vmatpush1.msra.mxu0 0.0
    %74 = vmatprep.subr.mxu0 0.0
    %75 = vmatpush1.msra.mxu0 0.0
    %76 = vmatprep.subr.mxu0 0.0
    %77 = vmatpush1.msra.mxu0 0.0
    %78 = vmatprep.subr.mxu0 0.0
    %79 = vmatpush1.msra.mxu0 0.0
    %80 = vmatprep.subr.mxu0 0.0
    %81 = vmatpush1.msra.mxu0 0.0
    %82 = vmatprep.subr.mxu0 0.0
    %83 = vmatpush1.msra.mxu0 0.0
    %84 = vmatprep.subr.mxu0 0.0
    %85 = vmatpush1.msra.mxu0 0.0
    %86 = vmatprep.subr.mxu0 0.0
    %87 = vmatpush1.msra.mxu0 0.0
    %88 = vmatprep.subr.mxu0 0.0
    %89 = vmatpush1.msra.mxu0 0.0
    %90 = vmatprep.subr.mxu0 0.0
    %91 = vmatpush1.msra.mxu0 0.0
    %92 = vmatprep.subr.mxu0 0.0
    %93 = vmatpush1.msra.mxu0 0.0
    %94 = vmatprep.subr.mxu0 0.0
    %95 = vmatpush1.msra.mxu0 0.0
    %96 = vmatprep.subr.mxu0 0.0
    %97 = vmatpush1.msra.mxu0 0.0
    %98 = vmatprep.subr.mxu0 0.0
    %99 = vmatpush1.msra.mxu0 0.0
    %100 = vmatprep.subr.mxu0 0.0
    %101 = vmatpush1.msra.mxu0 0.0
    %102 = vmatprep.subr.mxu0 0.0
    %103 = vmatpush1.msra.mxu0 0.0
    %104 = vmatprep.subr.mxu0 0.0
    %105 = vmatpush1.msra.mxu0 0.0
    %106 = vmatprep.subr.mxu0 0.0
    %107 = vmatpush1.msra.mxu0 0.0
    %108 = vmatprep.subr.mxu0 0.0
    %109 = vmatpush1.msra.mxu0 0.0
    %110 = vmatprep.subr.mxu0 0.0
    %111 = vmatpush1.msra.mxu0 0.0
    %112 = vmatprep.subr.mxu0 0.0
    %113 = vmatpush1.msra.mxu0 0.0
    %114 = vmatprep.subr.mxu0 0.0
    %115 = vmatpush1.msra.mxu0 0.0
    %116 = vmatprep.subr.mxu0 0.0
    %117 = vmatpush1.msra.mxu0 0.0
    %118 = vmatprep.subr.mxu0 0.0
    %119 = vmatpush1.msra.mxu0 0.0
    %120 = vmatprep.subr.mxu0 0.0
    %121 = vmatpush1.msra.mxu0 0.0
    %122 = vmatprep.subr.mxu0 0.0
    %123 = vmatpush1.msra.mxu0 0.0
    %124 = vmatprep.mubr.f32.mxu0 0.0
    %125 = vmatmul.mubr.f32.gmra.mrb[0].mxu0 %v46
    %v126 = vpop.f32.mrb[0].mxu0
    %v127 = vadd.f32 0.0, %v126
    %v128 = vpop.f32.mrb[0].mxu0
    %v129 = vadd.f32 0.0, %v128
    %130 = vmatprep.mubr.f32.mxu0 0.0
    %131 = vmatmul.mubr.f32.gmra.mrb[0].mxu0 %v49
    %v132 = vpop.f32.mrb[0].mxu0
    %v133 = vadd.f32 0.0, %v132
    %v134 = vpop.f32.mrb[0].mxu0
    %v135 = vadd.f32 0.0, %v134
    %136 = vmatprep.mubr.f32.mxu0 0.0
    %137 = vmatmul.mubr.f32.gmra.mrb[0].mxu0 %v52
    %v138 = vpop.f32.mrb[0].mxu0
    %v139 = vadd.f32 0.0, %v138
    %v140 = vpop.f32.mrb[0].mxu0
    %v141 = vadd.f32 0.0, %v140
    %142 = vmatprep.mubr.f32.mxu0 0.0
    %143 = vmatmul.mubr.f32.gmra.mrb[0].mxu0 %v55
    %v144 = vpop.f32.mrb[0].mxu0
    %v145 = vadd.f32 0.0, %v144
    %v146 = vpop.f32.mrb[0].mxu0
    %v147 = vadd.f32 0.0, %v146
    %148 = vmatprep.mubr.f32.mxu0 0.0
    %149 = vmatmul.mubr.f32.gmra.mrb[0].mxu0 %v58
    %v150 = vpop.f32.mrb[0].mxu0
    %v151 = vadd.f32 0.0, %v150
    %v152 = vpop.f32.mrb[0].mxu0
    %v153 = vadd.f32 0.0, %v152
    %154 = vdwg.mxu0
    %v155 = vld [vmem:[#allocation4 + $0x28] sm:$0xff]
    %v156 = vld [vmem:[#allocation4 + $0x30] sm:$0xff]
    %v157 = vld [vmem:[#allocation4 + $0x38] sm:$0xff]
    %v158 = vld [vmem:[#allocation4 + $0x40] sm:$0xff]
    %v159 = vld [vmem:[#allocation4 + $0x48] sm:$0xff]
    %v160 = vld [vmem:[#allocation4 + $0x50] sm:$0xff]
    %v161 = vld [vmem:[#allocation4 + $0x58] sm:$0xff]
    %v162 = vld [vmem:[#allocation4 + $0x60] sm:$0xff]
    %v163 = vld [vmem:[#allocation4 + $0x68] sm:$0xff]
    %v164 = vld [vmem:[#allocation4 + $0x70] sm:$0xff]
    %v165 = vld [vmem:[#allocation4 + $0x78] sm:$0xff]
    %v166 = vld [vmem:[#allocation4 + $0x80] sm:$0xff]
    %v167 = vld [vmem:[#allocation4 + $0x88] sm:$0xff]
    %vm168 = vcmask 326656
    %v170 = vsel %vm168, %v155, 0
    %v173 = vsel %vm168, %v156, 0
    %v176 = vsel %vm168, %v157, 0
    %v179 = vsel %vm168, %v158, 0
    %v182 = vsel %vm168, %v159, 0
    %v185 = vsel %vm168, %v160, 0
    %v188 = vsel %vm168, %v161, 0
    %v191 = vsel %vm168, %v162, 0
    %v194 = vsel %vm168, %v163, 0
    %196 = vmatprep.subr.mxu0 %v129
    %197 = vmatpush1.msra.mxu0 %v127
    %198 = vmatprep.subr.mxu0 %v135
    %199 = vmatpush1.msra.mxu0 %v133
    %200 = vmatprep.subr.mxu0 %v141
    %201 = vmatpush1.msra.mxu0 %v139
    %202 = vmatprep.subr.mxu0 %v147
    %203 = vmatpush1.msra.mxu0 %v145
    %204 = vmatprep.subr.mxu0 %v153
    %205 = vmatpush1.msra.mxu0 %v151
    %206 = vmatprep.subr.mxu0 0.0
    %207 = vmatpush1.msra.mxu0 0.0
    %208 = vmatprep.subr.mxu0 0.0
    %209 = vmatpush1.msra.mxu0 0.0
    %210 = vmatprep.subr.mxu0 0.0
    %211 = vmatpush1.msra.mxu0 0.0
    %212 = vmatprep.subr.mxu0 0.0
    %213 = vmatpush1.msra.mxu0 0.0
    %214 = vmatprep.subr.mxu0 0.0
    %215 = vmatpush1.msra.mxu0 0.0
    %216 = vmatprep.subr.mxu0 0.0
    %217 = vmatpush1.msra.mxu0 0.0
    %218 = vmatprep.subr.mxu0 0.0
    %219 = vmatpush1.msra.mxu0 0.0
    %220 = vmatprep.subr.mxu0 0.0
    %221 = vmatpush1.msra.mxu0 0.0
    %222 = vmatprep.subr.mxu0 0.0
    %223 = vmatpush1.msra.mxu0 0.0
    %224 = vmatprep.subr.mxu0 0.0
    %225 = vmatpush1.msra.mxu0 0.0
    %226 = vmatprep.subr.mxu0 0.0
    %227 = vmatpush1.msra.mxu0 0.0
    %228 = vmatprep.subr.mxu0 0.0
    %229 = vmatpush1.msra.mxu0 0.0
    %230 = vmatprep.subr.mxu0 0.0
    %231 = vmatpush1.msra.mxu0 0.0
    %232 = vmatprep.subr.mxu0 0.0
    %233 = vmatpush1.msra.mxu0 0.0
    %234 = vmatprep.subr.mxu0 0.0
    %235 = vmatpush1.msra.mxu0 0.0
    %236 = vmatprep.subr.mxu0 0.0
    %237 = vmatpush1.msra.mxu0 0.0
    %238 = vmatprep.subr.mxu0 0.0
    %239 = vmatpush1.msra.mxu0 0.0
    %240 = vmatprep.subr.mxu0 0.0
    %241 = vmatpush1.msra.mxu0 0.0
    %242 = vmatprep.subr.mxu0 0.0
    %243 = vmatpush1.msra.mxu0 0.0
    %244 = vmatprep.subr.mxu0 0.0
    %245 = vmatpush1.msra.mxu0 0.0
    %246 = vmatprep.subr.mxu0 0.0
    %247 = vmatpush1.msra.mxu0 0.0
    %248 = vmatprep.subr.mxu0 0.0
    %249 = vmatpush1.msra.mxu0 0.0
    %250 = vmatprep.subr.mxu0 0.0
    %251 = vmatpush1.msra.mxu0 0.0
    %252 = vmatprep.subr.mxu0 0.0
    %253 = vmatpush1.msra.mxu0 0.0
    %254 = vmatprep.subr.mxu0 0.0
    %255 = vmatpush1.msra.mxu0 0.0
    %256 = vmatprep.subr.mxu0 0.0
    %257 = vmatpush1.msra.mxu0 0.0
    %258 = vmatprep.subr.mxu0 0.0
    %259 = vmatpush1.msra.mxu0 0.0
    %260 = vmatprep.mubr.f32.mxu0 0.0
    %261 = vmatmul.mubr.f32.gmra.mrb[0].mxu0 %v170
    %v262 = vpop.f32.mrb[0].mxu0
    %v263 = vadd.f32 0.0, %v262
    %v264 = vpop.f32.mrb[0].mxu0
    %v265 = vadd.f32 0.0, %v264
    %266 = vmatprep.mubr.f32.mxu0 0.0
    %267 = vmatmul.mubr.f32.gmra.mrb[0].mxu0 %v173
    %v268 = vpop.f32.mrb[0].mxu0
    %v269 = vadd.f32 0.0, %v268
    %v270 = vpop.f32.mrb[0].mxu0
    %v271 = vadd.f32 0.0, %v270
    %272 = vmatprep.mubr.f32.mxu0 0.0
    %273 = vmatmul.mubr.f32.gmra.mrb[0].mxu0 %v176
    %v274 = vpop.f32.mrb[0].mxu0
    %v275 = vadd.f32 0.0, %v274
    %v276 = vpop.f32.mrb[0].mxu0
    %v277 = vadd.f32 0.0, %v276
    %278 = vmatprep.mubr.f32.mxu0 0.0
    %279 = vmatmul.mubr.f32.gmra.mrb[0].mxu0 %v179
    %v280 = vpop.f32.mrb[0].mxu0
    %v281 = vadd.f32 0.0, %v280
    %v282 = vpop.f32.mrb[0].mxu0
    %v283 = vadd.f32 0.0, %v282
    %284 = vmatprep.mubr.f32.mxu0 0.0
    %285 = vmatmul.mubr.f32.gmra.mrb[0].mxu0 %v182
    %v286 = vpop.f32.mrb[0].mxu0
    %v287 = vadd.f32 0.0, %v286
    %v288 = vpop.f32.mrb[0].mxu0
    %v289 = vadd.f32 0.0, %v288
    %290 = vmatprep.mubr.f32.mxu0 0.0
    %291 = vmatmul.mubr.f32.gmra.mrb[0].mxu0 %v185
    %v292 = vpop.f32.mrb[0].mxu0
    %v293 = vadd.f32 0.0, %v292
    %v294 = vpop.f32.mrb[0].mxu0
    %v295 = vadd.f32 0.0, %v294
    %296 = vmatprep.mubr.f32.mxu0 0.0
    %297 = vmatmul.mubr.f32.gmra.mrb[0].mxu0 %v188
    %v298 = vpop.f32.mrb[0].mxu0
    %v299 = vadd.f32 0.0, %v298
    %v300 = vpop.f32.mrb[0].mxu0
    %v301 = vadd.f32 0.0, %v300
    %302 = vmatprep.mubr.f32.mxu0 0.0
    %303 = vmatmul.mubr.f32.gmra.mrb[0].mxu0 %v191
    %v304 = vpop.f32.mrb[0].mxu0
    %v305 = vadd.f32 0.0, %v304
    %v306 = vpop.f32.mrb[0].mxu0
    %v307 = vadd.f32 0.0, %v306
    %308 = vmatprep.mubr.f32.mxu0 0.0
    %309 = vmatmul.mubr.f32.gmra.mrb[0].mxu0 %v194
    %v310 = vpop.f32.mrb[0].mxu0
    %v311 = vadd.f32 0.0, %v310
    %v312 = vpop.f32.mrb[0].mxu0
    %v313 = vadd.f32 0.0, %v312
    %314 = vdwg.mxu0
    %vm315 = vcmp.gt.f32.partialorder %v263, 0.0
    %vm316 = vcmp.gt.f32.partialorder %v265, 0.0
    %vm317 = vcmp.gt.f32.partialorder %v269, 0.0
    %vm318 = vcmp.gt.f32.partialorder %v271, 0.0
    %vm319 = vcmp.gt.f32.partialorder %v275, 0.0
    %vm320 = vcmp.gt.f32.partialorder %v277, 0.0
    %vm321 = vcmp.gt.f32.partialorder %v281, 0.0
    %vm322 = vcmp.gt.f32.partialorder %v283, 0.0
    %vm323 = vcmp.gt.f32.partialorder %v287, 0.0
    %vm324 = vcmp.gt.f32.partialorder %v289, 0.0
    %vm325 = vcmp.gt.f32.partialorder %v293, 0.0
    %vm326 = vcmp.gt.f32.partialorder %v295, 0.0
    %vm327 = vcmp.gt.f32.partialorder %v299, 0.0
    %vm328 = vcmp.gt.f32.partialorder %v301, 0.0
    %vm329 = vcmp.gt.f32.partialorder %v305, 0.0
    %vm330 = vcmp.gt.f32.partialorder %v307, 0.0
    %vm331 = vcmp.gt.f32.partialorder %v311, 0.0
    %vm332 = vcmp.gt.f32.partialorder %v313, 0.0
    %v333 = vmul.f32 %v263, 0.01
    %v334 = vmul.f32 %v265, 0.01
    %v335 = vmul.f32 %v269, 0.01
    %v336 = vmul.f32 %v271, 0.01
    %v337 = vmul.f32 %v275, 0.01
    %v338 = vmul.f32 %v277, 0.01
    %v339 = vmul.f32 %v281, 0.01
    %v340 = vmul.f32 %v283, 0.01
    %v341 = vmul.f32 %v287, 0.01
    %v342 = vmul.f32 %v289, 0.01
    %v343 = vmul.f32 %v293, 0.01
    %v344 = vmul.f32 %v295, 0.01
    %v345 = vmul.f32 %v299, 0.01
    %v346 = vmul.f32 %v301, 0.01
    %v347 = vmul.f32 %v305, 0.01
    %v348 = vmul.f32 %v307, 0.01
    %v349 = vmul.f32 %v311, 0.01
    %v350 = vmul.f32 %v313, 0.01
    %v351 = vsel %vm315, %v263, %v333
    %v352 = vsel %vm316, %v265, %v334
    %v353 = vsel %vm317, %v269, %v335
    %v354 = vsel %vm318, %v271, %v336
    %v355 = vsel %vm319, %v275, %v337
    %v356 = vsel %vm320, %v277, %v338
    %v357 = vsel %vm321, %v281, %v339
    %v358 = vsel %vm322, %v283, %v340
    %v359 = vsel %vm323, %v287, %v341
    %v360 = vsel %vm324, %v289, %v342
    %v361 = vsel %vm325, %v293, %v343
    %v362 = vsel %vm326, %v295, %v344
    %v363 = vsel %vm327, %v299, %v345
    %v364 = vsel %vm328, %v301, %v346
    %v365 = vsel %vm329, %v305, %v347
    %v366 = vsel %vm330, %v307, %v348
    %v367 = vsel %vm331, %v311, %v349
    %v368 = vsel %vm332, %v313, %v350
    %vm369 = vcmask 588800
    %v371 = vsel %vm369, %v164, 0
    %v374 = vsel %vm369, %v165, 0
    %v377 = vsel %vm369, %v166, 0
    %v380 = vsel %vm369, %v167, 0
    %382 = vmatprep.subr.mxu0 %v352
    %383 = vmatpush1.msra.mxu0 %v351
    %384 = vmatprep.subr.mxu0 %v354
    %385 = vmatpush1.msra.mxu0 %v353
    %386 = vmatprep.subr.mxu0 %v356
    %387 = vmatpush1.msra.mxu0 %v355
    %388 = vmatprep.subr.mxu0 %v358
    %389 = vmatpush1.msra.mxu0 %v357
    %390 = vmatprep.subr.mxu0 %v360
    %391 = vmatpush1.msra.mxu0 %v359
    %392 = vmatprep.subr.mxu0 %v362
    %393 = vmatpush1.msra.mxu0 %v361
    %394 = vmatprep.subr.mxu0 %v364
    %395 = vmatpush1.msra.mxu0 %v363
    %396 = vmatprep.subr.mxu0 %v366
    %397 = vmatpush1.msra.mxu0 %v365
    %398 = vmatprep.subr.mxu0 %v368
    %399 = vmatpush1.msra.mxu0 %v367
    %400 = vmatprep.subr.mxu0 0.0
    %401 = vmatpush1.msra.mxu0 0.0
    %402 = vmatprep.subr.mxu0 0.0
    %403 = vmatpush1.msra.mxu0 0.0
    %404 = vmatprep.subr.mxu0 0.0
    %405 = vmatpush1.msra.mxu0 0.0
    %406 = vmatprep.subr.mxu0 0.0
    %407 = vmatpush1.msra.mxu0 0.0
    %408 = vmatprep.subr.mxu0 0.0
    %409 = vmatpush1.msra.mxu0 0.0
    %410 = vmatprep.subr.mxu0 0.0
    %411 = vmatpush1.msra.mxu0 0.0
    %412 = vmatprep.subr.mxu0 0.0
    %413 = vmatpush1.msra.mxu0 0.0
    %414 = vmatprep.subr.mxu0 0.0
    %415 = vmatpush1.msra.mxu0 0.0
    %416 = vmatprep.subr.mxu0 0.0
    %417 = vmatpush1.msra.mxu0 0.0
    %418 = vmatprep.subr.mxu0 0.0
    %419 = vmatpush1.msra.mxu0 0.0
    %420 = vmatprep.subr.mxu0 0.0
    %421 = vmatpush1.msra.mxu0 0.0
    %422 = vmatprep.subr.mxu0 0.0
    %423 = vmatpush1.msra.mxu0 0.0
    %424 = vmatprep.subr.mxu0 0.0
    %425 = vmatpush1.msra.mxu0 0.0
    %426 = vmatprep.subr.mxu0 0.0
    %427 = vmatpush1.msra.mxu0 0.0
    %428 = vmatprep.subr.mxu0 0.0
    %429 = vmatpush1.msra.mxu0 0.0
    %430 = vmatprep.subr.mxu0 0.0
    %431 = vmatpush1.msra.mxu0 0.0
    %432 = vmatprep.subr.mxu0 0.0
    %433 = vmatpush1.msra.mxu0 0.0
    %434 = vmatprep.subr.mxu0 0.0
    %435 = vmatpush1.msra.mxu0 0.0
    %436 = vmatprep.subr.mxu0 0.0
    %437 = vmatpush1.msra.mxu0 0.0
    %438 = vmatprep.subr.mxu0 0.0
    %439 = vmatpush1.msra.mxu0 0.0
    %440 = vmatprep.subr.mxu0 0.0
    %441 = vmatpush1.msra.mxu0 0.0
    %442 = vmatprep.subr.mxu0 0.0
    %443 = vmatpush1.msra.mxu0 0.0
    %444 = vmatprep.subr.mxu0 0.0
    %445 = vmatpush1.msra.mxu0 0.0
    %446 = vmatprep.mubr.f32.mxu0 0.0
    %447 = vmatmul.mubr.f32.gmra.mrb[0].mxu0 %v371
    %v448 = vpop.f32.mrb[0].mxu0
    %v449 = vadd.f32 0.0, %v448
    %v450 = vpop.f32.mrb[0].mxu0
    %v451 = vadd.f32 0.0, %v450
    %452 = vmatprep.mubr.f32.mxu0 0.0
    %453 = vmatmul.mubr.f32.gmra.mrb[0].mxu0 %v374
    %v454 = vpop.f32.mrb[0].mxu0
    %v455 = vadd.f32 0.0, %v454
    %v456 = vpop.f32.mrb[0].mxu0
    %v457 = vadd.f32 0.0, %v456
    %458 = vmatprep.mubr.f32.mxu0 0.0
    %459 = vmatmul.mubr.f32.gmra.mrb[0].mxu0 %v377
    %v460 = vpop.f32.mrb[0].mxu0
    %v461 = vadd.f32 0.0, %v460
    %v462 = vpop.f32.mrb[0].mxu0
    %v463 = vadd.f32 0.0, %v462
    %464 = vmatprep.mubr.f32.mxu0 0.0
    %465 = vmatmul.mubr.f32.gmra.mrb[0].mxu0 %v380
    %v466 = vpop.f32.mrb[0].mxu0
    %v467 = vadd.f32 0.0, %v466
    %v468 = vpop.f32.mrb[0].mxu0
    %v469 = vadd.f32 0.0, %v468
    %470 = vdwg.mxu0
    %v471 = vadd.f32 %v449, %v455
    %v472 = vadd.f32 %v471, %v461
    %v473 = vadd.f32 %v472, %v467
    %v474 = vrot.slane %v473, 4
    %v475 = vadd.f32 %v473, %v474
    %v476 = vrot.slane %v475, 2
    %v477 = vadd.f32 %v475, %v476
    %v478 = vrot.slane %v477, 1
    %v479 = vadd.f32 %v477, %v478
    %v480 = vadd.f32 %v451, %v457
    %v481 = vadd.f32 %v480, %v463
    %v482 = vadd.f32 %v481, %v469
    %v483 = vrot.slane %v482, 4
    %v484 = vadd.f32 %v482, %v483
    %v485 = vrot.slane %v484, 2
    %v486 = vadd.f32 %v484, %v485
    %v487 = vrot.slane %v486, 1
    %v488 = vadd.f32 %v486, %v487
    %v489 = vrcp.pop 32.0
    %v490 = vmul.f32 %v479, %v489
    %v491 = vmul.f32 %v488, %v489
    %v492 = vsub.f32 %v449, %v490
    %v493 = vsub.f32 %v451, %v491
    %v494 = vsub.f32 %v455, %v490
    %v495 = vsub.f32 %v457, %v491
    %v496 = vsub.f32 %v461, %v490
    %v497 = vsub.f32 %v463, %v491
    %v498 = vsub.f32 %v467, %v490
    %v499 = vsub.f32 %v469, %v491
    %v500 = vmul.f32 %v492, %v492
    %v501 = vmul.f32 %v493, %v493
    %v502 = vmul.f32 %v494, %v494
    %v503 = vmul.f32 %v495, %v495
    %v504 = vmul.f32 %v496, %v496
    %v505 = vmul.f32 %v497, %v497
    %v506 = vmul.f32 %v498, %v498
    %v507 = vmul.f32 %v499, %v499
    %v508 = vadd.f32 %v500, %v502
    %v509 = vadd.f32 %v508, %v504
    %v510 = vadd.f32 %v509, %v506
    %v511 = vrot.slane %v510, 4
    %v512 = vadd.f32 %v510, %v511
    %v513 = vrot.slane %v512, 2
    %v514 = vadd.f32 %v512, %v513
    %v515 = vrot.slane %v514, 1
    %v516 = vadd.f32 %v514, %v515
    %v517 = vadd.f32 %v501, %v503
    %v518 = vadd.f32 %v517, %v505
    %v519 = vadd.f32 %v518, %v507
    %v520 = vrot.slane %v519, 4
    %v521 = vadd.f32 %v519, %v520
    %v522 = vrot.slane %v521, 2
    %v523 = vadd.f32 %v521, %v522
    %v524 = vrot.slane %v523, 1
    %v525 = vadd.f32 %v523, %v524
    %v526 = vmul.f32 %v516, %v489
    %v527 = vmul.f32 %v525, %v489
    %v528 = vadd.f32 %v526, 1e-05
    %v529 = vadd.f32 %v527, 1e-05
    %v530 = vrsqrt.pop %v528
    %v531 = vrsqrt.pop %v529
    %v532 = vmul.f32 %v492, %v530
    %v533 = vmul.f32 %v493, %v531
    %v534 = vmul.f32 %v494, %v530
    %v535 = vmul.f32 %v495, %v531
    %v536 = vmul.f32 %v496, %v530
    %v537 = vmul.f32 %v497, %v531
    %v538 = vmul.f32 %v498, %v530
    %v539 = vmul.f32 %v499, %v531
    %v540 = vadd.f32 %v127, %v532
    %v541 = vadd.f32 %v129, %v533
    %v542 = vadd.f32 %v133, %v534
    %v543 = vadd.f32 %v135, %v535
    %v544 = vadd.f32 %v139, %v536
    %v545 = vadd.f32 %v141, %v537
    %v546 = vadd.f32 %v145, %v538
    %v547 = vadd.f32 %v147, %v539
    %v548 = vld [vmem:[#allocation4 + $0x90] sm:$0xff]
    %v549 = vld [vmem:[#allocation4 + $0x98] sm:$0xff]
    %v550 = vld [vmem:[#allocation4 + $0xa0] sm:$0xff]
    %v551 = vld [vmem:[#allocation4 + $0xa8] sm:$0xff]
    %v552 = vld [vmem:[#allocation4 + $0xb0] sm:$0xff]
    %v553 = vld [vmem:[#allocation4 + $0xb8] sm:$0xff]
    %v554 = vld [vmem:[#allocation4 + $0xc0] sm:$0xff]
    %v555 = vld [vmem:[#allocation4 + $0xc8] sm:$0xff]
    %v556 = vld [vmem:[#allocation4 + $0xd0] sm:$0xff]
    %v557 = vld [vmem:[#allocation4 + $0xd8] sm:$0xff]
    %v558 = vld [vmem:[#allocation4 + $0xe0] sm:$0xff]
    %v559 = vld [vmem:[#allocation4 + $0xe8] sm:$0xff]
    %v560 = vld [vmem:[#allocation4 + $0xf0] sm:$0xff]
    %v562 = vsel %vm168, %v548, 0
    %v565 = vsel %vm168, %v549, 0
    %v568 = vsel %vm168, %v550, 0
    %v571 = vsel %vm168, %v551, 0
    %v574 = vsel %vm168, %v552, 0
    %v577 = vsel %vm168, %v553, 0
    %v580 = vsel %vm168, %v554, 0
    %v583 = vsel %vm168, %v555, 0
    %v586 = vsel %vm168, %v556, 0
    %588 = vmatprep.subr.mxu0 %v541
    %589 = vmatpush1.msra.mxu0 %v540
    %590 = vmatprep.subr.mxu0 %v543
    %591 = vmatpush1.msra.mxu0 %v542
    %592 = vmatprep.subr.mxu0 %v545
    %593 = vmatpush1.msra.mxu0 %v544
    %594 = vmatprep.subr.mxu0 %v547
    %595 = vmatpush1.msra.mxu0 %v546
    %596 = vmatprep.subr.mxu0 %v153
    %597 = vmatpush1.msra.mxu0 %v151
    %598 = vmatprep.subr.mxu0 0.0
    %599 = vmatpush1.msra.mxu0 0.0
    %600 = vmatprep.subr.mxu0 0.0
    %601 = vmatpush1.msra.mxu0 0.0
    %602 = vmatprep.subr.mxu0 0.0
    %603 = vmatpush1.msra.mxu0 0.0
    %604 = vmatprep.subr.mxu0 0.0
    %605 = vmatpush1.msra.mxu0 0.0
    %606 = vmatprep.subr.mxu0 0.0
    %607 = vmatpush1.msra.mxu0 0.0
    %608 = vmatprep.subr.mxu0 0.0
    %609 = vmatpush1.msra.mxu0 0.0
    %610 = vmatprep.subr.mxu0 0.0
    %611 = vmatpush1.msra.mxu0 0.0
    %612 = vmatprep.subr.mxu0 0.0
    %613 = vmatpush1.msra.mxu0 0.0
    %614 = vmatprep.subr.mxu0 0.0
    %615 = vmatpush1.msra.mxu0 0.0
    %616 = vmatprep.subr.mxu0 0.0
    %617 = vmatpush1.msra.mxu0 0.0
    %618 = vmatprep.subr.mxu0 0.0
    %619 = vmatpush1.msra.mxu0 0.0
    %620 = vmatprep.subr.mxu0 0.0
    %621 = vmatpush1.msra.mxu0 0.0
    %622 = vmatprep.subr.mxu0 0.0
    %623 = vmatpush1.msra.mxu0 0.0
    %624 = vmatprep.subr.mxu0 0.0
    %625 = vmatpush1.msra.mxu0 0.0
    %626 = vmatprep.subr.mxu0 0.0
    %627 = vmatpush1.msra.mxu0 0.0
    %628 = vmatprep.subr.mxu0 0.0
    %629 = vmatpush1.msra.mxu0 0.0
    %630 = vmatprep.subr.mxu0 0.0
    %631 = vmatpush1.msra.mxu0 0.0
    %632 = vmatprep.subr.mxu0 0.0
    %633 = vmatpush1.msra.mxu0 0.0
    %634 = vmatprep.subr.mxu0 0.0
    %635 = vmatpush1.msra.mxu0 0.0
    %636 = vmatprep.subr.mxu0 0.0
    %637 = vmatpush1.msra.mxu0 0.0
    %638 = vmatprep.subr.mxu0 0.0
    %639 = vmatpush1.msra.mxu0 0.0
    %640 = vmatprep.subr.mxu0 0.0
    %641 = vmatpush1.msra.mxu0 0.0
    %642 = vmatprep.subr.mxu0 0.0
    %643 = vmatpush1.msra.mxu0 0.0
    %644 = vmatprep.subr.mxu0 0.0
    %645 = vmatpush1.msra.mxu0 0.0
    %646 = vmatprep.subr.mxu0 0.0
    %647 = vmatpush1.msra.mxu0 0.0
    %648 = vmatprep.subr.mxu0 0.0
    %649 = vmatpush1.msra.mxu0 0.0
    %650 = vmatprep.subr.mxu0 0.0
    %651 = vmatpush1.msra.mxu0 0.0
    %652 = vmatprep.mubr.f32.mxu0 0.0
    %653 = vmatmul.mubr.f32.gmra.mrb[0].mxu0 %v562
    %v654 = vpop.f32.mrb[0].mxu0
    %v655 = vadd.f32 0.0, %v654
    %v656 = vpop.f32.mrb[0].mxu0
    %v657 = vadd.f32 0.0, %v656
    %658 = vmatprep.mubr.f32.mxu0 0.0
    %659 = vmatmul.mubr.f32.gmra.mrb[0].mxu0 %v565
    %v660 = vpop.f32.mrb[0].mxu0
    %v661 = vadd.f32 0.0, %v660
    %v662 = vpop.f32.mrb[0].mxu0
    %v663 = vadd.f32 0.0, %v662
    %664 = vmatprep.mubr.f32.mxu0 0.0
    %665 = vmatmul.mubr.f32.gmra.mrb[0].mxu0 %v568
    %v666 = vpop.f32.mrb[0].mxu0
    %v667 = vadd.f32 0.0, %v666
    %v668 = vpop.f32.mrb[0].mxu0
    %v669 = vadd.f32 0.0, %v668
    %670 = vmatprep.mubr.f32.mxu0 0.0
    %671 = vmatmul.mubr.f32.gmra.mrb[0].mxu0 %v571
    %v672 = vpop.f32.mrb[0].mxu0
    %v673 = vadd.f32 0.0, %v672
    %v674 = vpop.f32.mrb[0].mxu0
    %v675 = vadd.f32 0.0, %v674
    %676 = vmatprep.mubr.f32.mxu0 0.0
    %677 = vmatmul.mubr.f32.gmra.mrb[0].mxu0 %v574
    %v678 = vpop.f32.mrb[0].mxu0
    %v679 = vadd.f32 0.0, %v678
    %v680 = vpop.f32.mrb[0].mxu0
    %v681 = vadd.f32 0.0, %v680
    %682 = vmatprep.mubr.f32.mxu0 0.0
    %683 = vmatmul.mubr.f32.gmra.mrb[0].mxu0 %v577
    %v684 = vpop.f32.mrb[0].mxu0
    %v685 = vadd.f32 0.0, %v684
    %v686 = vpop.f32.mrb[0].mxu0
    %v687 = vadd.f32 0.0, %v686
    %688 = vmatprep.mubr.f32.mxu0 0.0
    %689 = vmatmul.mubr.f32.gmra.mrb[0].mxu0 %v580
    %v690 = vpop.f32.mrb[0].mxu0
    %v691 = vadd.f32 0.0, %v690
    %v692 = vpop.f32.mrb[0].mxu0
    %v693 = vadd.f32 0.0, %v692
    %694 = vmatprep.mubr.f32.mxu0 0.0
    %695 = vmatmul.mubr.f32.gmra.mrb[0].mxu0 %v583
    %v696 = vpop.f32.mrb[0].mxu0
    %v697 = vadd.f32 0.0, %v696
    %v698 = vpop.f32.mrb[0].mxu0
    %v699 = vadd.f32 0.0, %v698
    %700 = vmatprep.mubr.f32.mxu0 0.0
    %701 = vmatmul.mubr.f32.gmra.mrb[0].mxu0 %v586
    %v702 = vpop.f32.mrb[0].mxu0
    %v703 = vadd.f32 0.0, %v702
    %v704 = vpop.f32.mrb[0].mxu0
    %v705 = vadd.f32 0.0, %v704
    %706 = vdwg.mxu0
    %vm707 = vcmp.gt.f32.partialorder %v655, 0.0
    %vm708 = vcmp.gt.f32.partialorder %v657, 0.0
    %vm709 = vcmp.gt.f32.partialorder %v661, 0.0
    %vm710 = vcmp.gt.f32.partialorder %v663, 0.0
    %vm711 = vcmp.gt.f32.partialorder %v667, 0.0
    %vm712 = vcmp.gt.f32.partialorder %v669, 0.0
    %vm713 = vcmp.gt.f32.partialorder %v673, 0.0
    %vm714 = vcmp.gt.f32.partialorder %v675, 0.0
    %vm715 = vcmp.gt.f32.partialorder %v679, 0.0
    %vm716 = vcmp.gt.f32.partialorder %v681, 0.0
    %vm717 = vcmp.gt.f32.partialorder %v685, 0.0
    %vm718 = vcmp.gt.f32.partialorder %v687, 0.0
    %vm719 = vcmp.gt.f32.partialorder %v691, 0.0
    %vm720 = vcmp.gt.f32.partialorder %v693, 0.0
    %vm721 = vcmp.gt.f32.partialorder %v697, 0.0
    %vm722 = vcmp.gt.f32.partialorder %v699, 0.0
    %vm723 = vcmp.gt.f32.partialorder %v703, 0.0
    %vm724 = vcmp.gt.f32.partialorder %v705, 0.0
    %v725 = vmul.f32 %v655, 0.01
    %v726 = vmul.f32 %v657, 0.01
    %v727 = vmul.f32 %v661, 0.01
    %v728 = vmul.f32 %v663, 0.01
    %v729 = vmul.f32 %v667, 0.01
    %v730 = vmul.f32 %v669, 0.01
    %v731 = vmul.f32 %v673, 0.01
    %v732 = vmul.f32 %v675, 0.01
    %v733 = vmul.f32 %v679, 0.01
    %v734 = vmul.f32 %v681, 0.01
    %v735 = vmul.f32 %v685, 0.01
    %v736 = vmul.f32 %v687, 0.01
    %v737 = vmul.f32 %v691, 0.01
    %v738 = vmul.f32 %v693, 0.01
    %v739 = vmul.f32 %v697, 0.01
    %v740 = vmul.f32 %v699, 0.01
    %v741 = vmul.f32 %v703, 0.01
    %v742 = vmul.f32 %v705, 0.01
    %v743 = vsel %vm707, %v655, %v725
    %v744 = vsel %vm708, %v657, %v726
    %v745 = vsel %vm709, %v661, %v727
    %v746 = vsel %vm710, %v663, %v728
    %v747 = vsel %vm711, %v667, %v729
    %v748 = vsel %vm712, %v669, %v730
    %v749 = vsel %vm713, %v673, %v731
    %v750 = vsel %vm714, %v675, %v732
    %v751 = vsel %vm715, %v679, %v733
    %v752 = vsel %vm716, %v681, %v734
    %v753 = vsel %vm717, %v685, %v735
    %v754 = vsel %vm718, %v687, %v736
    %v755 = vsel %vm719, %v691, %v737
    %v756 = vsel %vm720, %v693, %v738
    %v757 = vsel %vm721, %v697, %v739
    %v758 = vsel %vm722, %v699, %v740
    %v759 = vsel %vm723, %v703, %v741
    %v760 = vsel %vm724, %v705, %v742
    %v762 = vsel %vm369, %v557, 0
    %v765 = vsel %vm369, %v558, 0
    %v768 = vsel %vm369, %v559, 0
    %v771 = vsel %vm369, %v560, 0
    %773 = vmatprep.subr.mxu0 %v744
    %774 = vmatpush1.msra.mxu0 %v743
    %775 = vmatprep.subr.mxu0 %v746
    %776 = vmatpush1.msra.mxu0 %v745
    %777 = vmatprep.subr.mxu0 %v748
    %778 = vmatpush1.msra.mxu0 %v747
    %779 = vmatprep.subr.mxu0 %v750
    %780 = vmatpush1.msra.mxu0 %v749
    %781 = vmatprep.subr.mxu0 %v752
    %782 = vmatpush1.msra.mxu0 %v751
    %783 = vmatprep.subr.mxu0 %v754
    %784 = vmatpush1.msra.mxu0 %v753
    %785 = vmatprep.subr.mxu0 %v756
    %786 = vmatpush1.msra.mxu0 %v755
    %787 = vmatprep.subr.mxu0 %v758
    %788 = vmatpush1.msra.mxu0 %v757
    %789 = vmatprep.subr.mxu0 %v760
    %790 = vmatpush1.msra.mxu0 %v759
    %791 = vmatprep.subr.mxu0 0.0
    %792 = vmatpush1.msra.mxu0 0.0
    %793 = vmatprep.subr.mxu0 0.0
    %794 = vmatpush1.msra.mxu0 0.0
    %795 = vmatprep.subr.mxu0 0.0
    %796 = vmatpush1.msra.mxu0 0.0
    %797 = vmatprep.subr.mxu0 0.0
    %798 = vmatpush1.msra.mxu0 0.0
    %799 = vmatprep.subr.mxu0 0.0
    %800 = vmatpush1.msra.mxu0 0.0
    %801 = vmatprep.subr.mxu0 0.0
    %802 = vmatpush1.msra.mxu0 0.0
    %803 = vmatprep.subr.mxu0 0.0
    %804 = vmatpush1.msra.mxu0 0.0
    %805 = vmatprep.subr.mxu0 0.0
    %806 = vmatpush1.msra.mxu0 0.0
    %807 = vmatprep.subr.mxu0 0.0
    %808 = vmatpush1.msra.mxu0 0.0
    %809 = vmatprep.subr.mxu0 0.0
    %810 = vmatpush1.msra.mxu0 0.0
    %811 = vmatprep.subr.mxu0 0.0
    %812 = vmatpush1.msra.mxu0 0.0
    %813 = vmatprep.subr.mxu0 0.0
    %814 = vmatpush1.msra.mxu0 0.0
    %815 = vmatprep.subr.mxu0 0.0
    %816 = vmatpush1.msra.mxu0 0.0
    %817 = vmatprep.subr.mxu0 0.0
    %818 = vmatpush1.msra.mxu0 0.0
    %819 = vmatprep.subr.mxu0 0.0
    %820 = vmatpush1.msra.mxu0 0.0
    %821 = vmatprep.subr.mxu0 0.0
    %822 = vmatpush1.msra.mxu0 0.0
    %823 = vmatprep.subr.mxu0 0.0
    %824 = vmatpush1.msra.mxu0 0.0
    %825 = vmatprep.subr.mxu0 0.0
    %826 = vmatpush1.msra.mxu0 0.0
    %827 = vmatprep.subr.mxu0 0.0
    %828 = vmatpush1.msra.mxu0 0.0
    %829 = vmatprep.subr.mxu0 0.0
    %830 = vmatpush1.msra.mxu0 0.0
    %831 = vmatprep.subr.mxu0 0.0
    %832 = vmatpush1.msra.mxu0 0.0
    %833 = vmatprep.subr.mxu0 0.0
    %834 = vmatpush1.msra.mxu0 0.0
    %835 = vmatprep.subr.mxu0 0.0
    %836 = vmatpush1.msra.mxu0 0.0
    %837 = vmatprep.mubr.f32.mxu0 0.0
    %838 = vmatmul.mubr.f32.gmra.mrb[0].mxu0 %v762
    %v839 = vpop.f32.mrb[0].mxu0
    %v840 = vadd.f32 0.0, %v839
    %v841 = vpop.f32.mrb[0].mxu0
    %v842 = vadd.f32 0.0, %v841
    %843 = vmatprep.mubr.f32.mxu0 0.0
    %844 = vmatmul.mubr.f32.gmra.mrb[0].mxu0 %v765
    %v845 = vpop.f32.mrb[0].mxu0
    %v846 = vadd.f32 0.0, %v845
    %v847 = vpop.f32.mrb[0].mxu0
    %v848 = vadd.f32 0.0, %v847
    %849 = vmatprep.mubr.f32.mxu0 0.0
    %850 = vmatmul.mubr.f32.gmra.mrb[0].mxu0 %v768
    %v851 = vpop.f32.mrb[0].mxu0
    %v852 = vadd.f32 0.0, %v851
    %v853 = vpop.f32.mrb[0].mxu0
    %v854 = vadd.f32 0.0, %v853
    %855 = vmatprep.mubr.f32.mxu0 0.0
    %856 = vmatmul.mubr.f32.gmra.mrb[0].mxu0 %v771
    %v857 = vpop.f32.mrb[0].mxu0
    %v858 = vadd.f32 0.0, %v857
    %v859 = vpop.f32.mrb[0].mxu0
    %v860 = vadd.f32 0.0, %v859
    %861 = vdwg.mxu0
    %v862 = vadd.f32 %v840, %v846
    %v863 = vadd.f32 %v862, %v852
    %v864 = vadd.f32 %v863, %v858
    %v865 = vrot.slane %v864, 4
    %v866 = vadd.f32 %v864, %v865
    %v867 = vrot.slane %v866, 2
    %v868 = vadd.f32 %v866, %v867
    %v869 = vrot.slane %v868, 1
    %v870 = vadd.f32 %v868, %v869
    %v871 = vadd.f32 %v842, %v848
    %v872 = vadd.f32 %v871, %v854
    %v873 = vadd.f32 %v872, %v860
    %v874 = vrot.slane %v873, 4
    %v875 = vadd.f32 %v873, %v874
    %v876 = vrot.slane %v875, 2
    %v877 = vadd.f32 %v875, %v876
    %v878 = vrot.slane %v877, 1
    %v879 = vadd.f32 %v877, %v878
    %v880 = vmul.f32 %v870, %v489
    %v881 = vmul.f32 %v879, %v489
    %v882 = vsub.f32 %v840, %v880
    %v883 = vsub.f32 %v842, %v881
    %v884 = vsub.f32 %v846, %v880
    %v885 = vsub.f32 %v848, %v881
    %v886 = vsub.f32 %v852, %v880
    %v887 = vsub.f32 %v854, %v881
    %v888 = vsub.f32 %v858, %v880
    %v889 = vsub.f32 %v860, %v881
    %v890 = vmul.f32 %v882, %v882
    %v891 = vmul.f32 %v883, %v883
    %v892 = vmul.f32 %v884, %v884
    %v893 = vmul.f32 %v885, %v885
    %v894 = vmul.f32 %v886, %v886
    %v895 = vmul.f32 %v887, %v887
    %v896 = vmul.f32 %v888, %v888
    %v897 = vmul.f32 %v889, %v889
    %v898 = vadd.f32 %v890, %v892
    %v899 = vadd.f32 %v898, %v894
    %v900 = vadd.f32 %v899, %v896
    %v901 = vrot.slane %v900, 4
    %v902 = vadd.f32 %v900, %v901
    %v903 = vrot.slane %v902, 2
    %v904 = vadd.f32 %v902, %v903
    %v905 = vrot.slane %v904, 1
    %v906 = vadd.f32 %v904, %v905
    %v907 = vadd.f32 %v891, %v893
    %v908 = vadd.f32 %v907, %v895
    %v909 = vadd.f32 %v908, %v897
    %v910 = vrot.slane %v909, 4
    %v911 = vadd.f32 %v909, %v910
    %v912 = vrot.slane %v911, 2
    %v913 = vadd.f32 %v911, %v912
    %v914 = vrot.slane %v913, 1
    %v915 = vadd.f32 %v913, %v914
    %v916 = vmul.f32 %v906, %v489
    %v917 = vmul.f32 %v915, %v489
    %v918 = vadd.f32 %v916, 1e-05
    %v919 = vadd.f32 %v917, 1e-05
    %v920 = vrsqrt.pop %v918
    %v921 = vrsqrt.pop %v919
    %v922 = vmul.f32 %v882, %v920
    %v923 = vmul.f32 %v883, %v921
    %v924 = vmul.f32 %v884, %v920
    %v925 = vmul.f32 %v885, %v921
    %v926 = vmul.f32 %v886, %v920
    %v927 = vmul.f32 %v887, %v921
    %v928 = vmul.f32 %v888, %v920
    %v929 = vmul.f32 %v889, %v921
    %v930 = vadd.f32 %v540, %v922
    %v931 = vadd.f32 %v541, %v923
    %v932 = vadd.f32 %v542, %v924
    %v933 = vadd.f32 %v543, %v925
    %v934 = vadd.f32 %v544, %v926
    %v935 = vadd.f32 %v545, %v927
    %v936 = vadd.f32 %v546, %v928
    %v937 = vadd.f32 %v547, %v929
    %938 = vxpose.xlu0.b32.start [1/16] %v930, 128
    %939 = vxpose.xlu0.b32.cont [2/16] %v932, 128
    %940 = vxpose.xlu0.b32.cont [3/16] %v934, 128
    %941 = vxpose.xlu0.b32.cont [4/16] %v936, 128
    %942 = vxpose.xlu0.b32.cont [5/16] 0.0, 128
    %943 = vxpose.xlu0.b32.cont [6/16] 0.0, 128
    %944 = vxpose.xlu0.b32.cont [7/16] 0.0, 128
    %945 = vxpose.xlu0.b32.cont [8/16] 0.0, 128
    %946 = vxpose.xlu0.b32.cont [9/16] 0.0, 128
    %947 = vxpose.xlu0.b32.cont [10/16] 0.0, 128
    %948 = vxpose.xlu0.b32.cont [11/16] 0.0, 128
    %949 = vxpose.xlu0.b32.cont [12/16] 0.0, 128
    %950 = vxpose.xlu0.b32.cont [13/16] 0.0, 128
    %951 = vxpose.xlu0.b32.cont [14/16] 0.0, 128
    %952 = vxpose.xlu0.b32.cont [15/16] 0.0, 128
    %953 = vxpose.xlu0.b32.end [16/16] 0.0, 128
    %v954 = vpop.trf.xlu0
    %v955 = vpop.trf.xlu0
    %v956 = vpop.trf.xlu0
    %v957 = vpop.trf.xlu0
    %v958 = vpop.trf.xlu0
    %v959 = vpop.trf.xlu0
    %v960 = vpop.trf.xlu0
    %v961 = vpop.trf.xlu0
    %v962 = vpop.trf.xlu0
    %v963 = vpop.trf.xlu0
    %v964 = vpop.trf.xlu0
    %v965 = vpop.trf.xlu0
    %v966 = vpop.trf.xlu0
    %v967 = vpop.trf.xlu0
    %v968 = vpop.trf.xlu0
    %v969 = vpop.trf.xlu0
    %970 = vxpose.xlu0.b32.start [1/16] %v931, 128
    %971 = vxpose.xlu0.b32.cont [2/16] %v933, 128
    %972 = vxpose.xlu0.b32.cont [3/16] %v935, 128
    %973 = vxpose.xlu0.b32.cont [4/16] %v937, 128
    %974 = vxpose.xlu0.b32.cont [5/16] 0.0, 128
    %975 = vxpose.xlu0.b32.cont [6/16] 0.0, 128
    %976 = vxpose.xlu0.b32.cont [7/16] 0.0, 128
    %977 = vxpose.xlu0.b32.cont [8/16] 0.0, 128
    %978 = vxpose.xlu0.b32.cont [9/16] 0.0, 128
    %979 = vxpose.xlu0.b32.cont [10/16] 0.0, 128
    %980 = vxpose.xlu0.b32.cont [11/16] 0.0, 128
    %981 = vxpose.xlu0.b32.cont [12/16] 0.0, 128
    %982 = vxpose.xlu0.b32.cont [13/16] 0.0, 128
    %983 = vxpose.xlu0.b32.cont [14/16] 0.0, 128
    %984 = vxpose.xlu0.b32.cont [15/16] 0.0, 128
    %985 = vxpose.xlu0.b32.end [16/16] 0.0, 128
    %v986 = vpop.trf.xlu0
    %v987 = vpop.trf.xlu0
    %v988 = vpop.trf.xlu0
    %v989 = vpop.trf.xlu0
    %v990 = vpop.trf.xlu0
    %v991 = vpop.trf.xlu0
    %v992 = vpop.trf.xlu0
    %v993 = vpop.trf.xlu0
    %v994 = vpop.trf.xlu0
    %v995 = vpop.trf.xlu0
    %v996 = vpop.trf.xlu0
    %v997 = vpop.trf.xlu0
    %v998 = vpop.trf.xlu0
    %v999 = vpop.trf.xlu0
    %v1000 = vpop.trf.xlu0
    %v1001 = vpop.trf.xlu0
    %vm1002 = vcmask 261120
    %1003 = vst.msk [vmem:[%s2] sm:$0xff] %vm1002, %v954
    %1004 = vst.msk [vmem:[%s2 + $0x8] sm:$0xff] %vm1002, %v955
    %1005 = vst.msk [vmem:[%s2 + $0x10] sm:$0xff] %vm1002, %v956
    %1006 = vst.msk [vmem:[%s2 + $0x18] sm:$0xff] %vm1002, %v957
    %1007 = vst.msk [vmem:[%s2 + $0x20] sm:$0xff] %vm1002, %v958
    %1008 = vst.msk [vmem:[%s2 + $0x28] sm:$0xff] %vm1002, %v959
    %1009 = vst.msk [vmem:[%s2 + $0x30] sm:$0xff] %vm1002, %v960
    %1010 = vst.msk [vmem:[%s2 + $0x38] sm:$0xff] %vm1002, %v961
    %1011 = vst.msk [vmem:[%s2 + $0x40] sm:$0xff] %vm1002, %v962
    %1012 = vst.msk [vmem:[%s2 + $0x48] sm:$0xff] %vm1002, %v963
    %1013 = vst.msk [vmem:[%s2 + $0x50] sm:$0xff] %vm1002, %v964
    %1014 = vst.msk [vmem:[%s2 + $0x58] sm:$0xff] %vm1002, %v965
    %1015 = vst.msk [vmem:[%s2 + $0x60] sm:$0xff] %vm1002, %v966
    %1016 = vst.msk [vmem:[%s2 + $0x68] sm:$0xff] %vm1002, %v967
    %1017 = vst.msk [vmem:[%s2 + $0x70] sm:$0xff] %vm1002, %v968
    %1018 = vst.msk [vmem:[%s2 + $0x78] sm:$0xff] %vm1002, %v969
    %1019 = vst.msk [vmem:[%s2 + $0x80] sm:$0xff] %vm1002, %v986
    %1020 = vst.msk [vmem:[%s2 + $0x88] sm:$0xff] %vm1002, %v987
    %1021 = vst.msk [vmem:[%s2 + $0x90] sm:$0xff] %vm1002, %v988
    %1022 = vst.msk [vmem:[%s2 + $0x98] sm:$0xff] %vm1002, %v989
    %1023 = vst.msk [vmem:[%s2 + $0xa0] sm:$0xff] %vm1002, %v990
    %1024 = vst.msk [vmem:[%s2 + $0xa8] sm:$0xff] %vm1002, %v991
    %1025 = vst.msk [vmem:[%s2 + $0xb0] sm:$0xff] %vm1002, %v992
    %1026 = vst.msk [vmem:[%s2 + $0xb8] sm:$0xff] %vm1002, %v993
    %1027 = vst.msk [vmem:[%s2 + $0xc0] sm:$0xff] %vm1002, %v994
    %1028 = vst.msk [vmem:[%s2 + $0xc8] sm:$0xff] %vm1002, %v995
    %1029 = vst.msk [vmem:[%s2 + $0xd0] sm:$0xff] %vm1002, %v996
    %1030 = vst.msk [vmem:[%s2 + $0xd8] sm:$0xff] %vm1002, %v997
    %1031 = vst.msk [vmem:[%s2 + $0xe0] sm:$0xff] %vm1002, %v998
    %1032 = vst.msk [vmem:[%s2 + $0xe8] sm:$0xff] %vm1002, %v999
    %1033 = vst.msk [vmem:[%s2 + $0xf0] sm:$0xff] %vm1002, %v1000
    %1034 = vst.msk [vmem:[%s2 + $0xf8] sm:$0xff] %vm1002, %v1001
    // Predicated region
    $region18: #{tpu_custom_call.1} parent=1 // pred_check
      _
    $region19: #{tpu_custom_call.1} parent=1 // pred_check_branch
      %1036 = sbr.rel (0) target = $region21
    $region20: #{tpu_custom_call.1} parent=1 // pred_region
      _
    $region21: #{tpu_custom_call.1} parent=1 // pred_fallthru
      _
    // Predicated region
    $region22: #{tpu_custom_call.1} parent=1 // pred_check
      _
    $region23: #{tpu_custom_call.1} parent=1 // pred_check_branch
      %1038 = sbr.rel (0) target = $region25
    $region24: #{tpu_custom_call.1} parent=1 // pred_region
      _
    $region25: #{tpu_custom_call.1} parent=1 // pred_fallthru
      _
    %1039 = vsyncpa [#allocation3], 1
    %1040 = vsyncpa [#allocation5], 1

</llo_original>
